<compile_context>
chip_gen: v6e
topology: v6e:2x2x1
jax: 0.10.0
libtpu: 0.0.40
codegen_flags: <defaults>
</compile_context>

<pallas_src>
import jax
import jax.numpy as jnp
from jax.experimental import pallas as pl
from jax.experimental.pallas import tpu as pltpu

V = 25             # joints (fixed by the module)
C_IN = 3           # x, y, z
C_PACK = 8         # packed channel rows fed to the kernel (zero padded)
HID = 64           # hidden conv channels
C_OUT = 64         # module default out_channels
BN_EPS = 1e-5
COLS_TARGET = 4096  # target G * V * T columns handled per grid step


# ---------------------------------------------------------------------------
# Kernel: one grid step = G whole samples.  Per sample: folded BN -> 1x1 conv ->
# ReLU -> 1x1 conv -> ReLU (both branches fused via block-diagonal weights),
# producing a lane-dense (C_OUT, V*T) slab stored directly in output layout.
# ---------------------------------------------------------------------------
def _make_kernel(mode, groups):
    fused = mode == 2

    def kernel(x_ref, s_ref, f_ref, w1_ref, b1_ref, w2_ref, b2_ref, o_ref):
        s, f = s_ref[...], f_ref[...]
        w1, b1 = w1_ref[...], b1_ref[...]
        w2, b2 = w2_ref[...], b2_ref[...]
        for g in range(groups):                         # static unroll over samples
            xb = x_ref[g] * s + f                       # folded BatchNorm1d, (8, R)
            h = jnp.dot(w1, xb, preferred_element_type=jnp.float32) + b1
            h = jnp.maximum(h, 0.0)                     # (128, R) full-lane ReLU
            y = jnp.dot(w2, h, preferred_element_type=jnp.float32) + b2
            y = jnp.maximum(y, 0.0)
            if fused:                                   # joint + t_joint branch sum
                y = y[:C_OUT, :] + y[C_OUT:, :]         # aligned sublane slice-add
            o_ref[g] = y.astype(o_ref.dtype)            # lane-dense (64, V*T) store

    return kernel


# ---------------------------------------------------------------------------
# Parameter construction (deterministic, synthetic)
# ---------------------------------------------------------------------------
def make_embed_params(key):
    ks = jax.random.split(key, 8)
    nch = C_IN * V
    gamma = jax.random.uniform(ks[0], (nch,), jnp.float32, 0.5, 1.5)
    beta = 0.1 * jax.random.normal(ks[1], (nch,), jnp.float32)
    r_mean = 0.1 * jax.random.normal(ks[2], (nch,), jnp.float32)
    r_var = jax.random.uniform(ks[3], (nch,), jnp.float32, 0.5, 1.5)
    scale = gamma / jnp.sqrt(r_var + BN_EPS)
    shift = beta - r_mean * scale
    # BatchNorm1d channel index is c*V + v  ->  keep as (C, V)
    scale_cv = scale.reshape(C_IN, V)
    shift_cv = shift.reshape(C_IN, V)

    w1 = 0.2 * jax.random.normal(ks[4], (HID, C_IN), jnp.float32)   # conv1 weight (out,in)
    b1 = 0.05 * jax.random.normal(ks[5], (HID,), jnp.float32)
    w2 = 0.1 * jax.random.normal(ks[6], (C_OUT, HID), jnp.float32)  # conv2 weight (out,in)
    b2 = 0.05 * jax.random.normal(ks[7], (C_OUT,), jnp.float32)
    return dict(scale=scale_cv, shift=shift_cv, w1=w1, b1=b1, w2=w2, b2=b2)


# ---------------------------------------------------------------------------
# Forward wrapper
# ---------------------------------------------------------------------------
def block_joint_input_forward(inp, params_joint, params_tjpt, mode=2):
    """inp: (N, T, V*C_raw) float32.  Returns (N, C_OUT, V, T) like the PyTorch module."""
    N, T, VC = inp.shape
    C_raw = VC // V
    R = V * T                                       # lanes per sample (t fastest)

    x = inp.reshape(N, T, V, C_raw)
    if C_raw != C_IN:
        x = x[..., :C_IN]
    x = jnp.transpose(x, (0, 3, 2, 1))              # (N, C, V, T) - PyTorch NCHW view
    d = jnp.concatenate([jnp.zeros_like(x[..., :1]), x[..., 1:] - x[..., :-1]], axis=-1)

    # single packed kernel input: [joint | diff | zero-pad] on the channel axis
    xk = jnp.concatenate([x, d], axis=1) if mode == 2 else (x if mode == 0 else d)
    xk = jnp.pad(xk, ((0, 0), (0, C_PACK - xk.shape[1]), (0, 0), (0, 0)))
    xk = xk.reshape(N, C_PACK, R)

    # G whole samples per grid step: blocks big enough to amortize per-step pipeline
    # overhead, grid length kept >= 2 so v7x's two TensorCores both get work.
    G = 1
    for g in range(2, N + 1):
        if N % g == 0 and g * R <= COLS_TARGET and N // g >= 2:
            G = g
    grid = (N // G,)

    def per_col(p_cv):                              # (C_IN, V) -> (C_IN, V*T)
        return jnp.repeat(p_cv, T, axis=1)

    pj, pt = params_joint, params_tjpt
    if mode == 2:
        # branch fusion via block-diagonal weights -> one (128,8)@(8,R) and one
        # (128,128)@(128,R) matmul per sample instead of four skinny ones.
        s = jnp.concatenate([per_col(pj["scale"]), per_col(pt["scale"])], axis=0)
        f = jnp.concatenate([per_col(pj["shift"]), per_col(pt["shift"])], axis=0)
        w1 = jnp.zeros((2 * HID, C_PACK), jnp.float32)
        w1 = w1.at[:HID, :C_IN].set(pj["w1"]).at[HID:, C_IN:2 * C_IN].set(pt["w1"])
        b1 = jnp.concatenate([pj["b1"], pt["b1"]]).reshape(2 * HID, 1)
        w2 = jnp.zeros((2 * C_OUT, 2 * HID), jnp.float32)
        w2 = w2.at[:C_OUT, :HID].set(pj["w2"]).at[C_OUT:, HID:].set(pt["w2"])
        b2 = jnp.concatenate([pj["b2"], pt["b2"]]).reshape(2 * C_OUT, 1)
    else:
        p = pj if mode == 0 else pt
        s, f = per_col(p["scale"]), per_col(p["shift"])
        w1 = jnp.pad(p["w1"], ((0, 0), (0, C_PACK - C_IN)))
        b1 = p["b1"].reshape(HID, 1)
        w2, b2 = p["w2"], p["b2"].reshape(C_OUT, 1)
    # BN constants stay at their natural per-sample period (., V*T): they do not grow
    # with the batch and are block-constant across the grid.
    s = jnp.pad(s, ((0, C_PACK - s.shape[0]), (0, 0)))
    f = jnp.pad(f, ((0, C_PACK - f.shape[0]), (0, 0)))

    const = lambda a: pl.BlockSpec(a.shape, lambda i: (0, 0))
    out3 = pl.pallas_call(
        _make_kernel(mode, G),
        out_shape=jax.ShapeDtypeStruct((N, C_OUT, R), jnp.float32),
        grid=grid,
        in_specs=[pl.BlockSpec((G, C_PACK, R), lambda i: (i, 0, 0)),
                  const(s), const(f), const(w1), const(b1), const(w2), const(b2)],
        out_specs=pl.BlockSpec((G, C_OUT, R), lambda i: (i, 0, 0)),
        compiler_params=pltpu.CompilerParams(dimension_semantics=("parallel",)),
    )(xk, s, f, w1, b1, w2, b2)

    # (N, C_OUT, V*T) -> (N, C_OUT, V, T): free reshape, no post-kernel transpose pass.
    return out3.reshape(N, C_OUT, V, T)


# ---------------------------------------------------------------------------
# Pure-JAX reference (mirrors the PyTorch math in NCHW layout) for verification
# ---------------------------------------------------------------------------
def _ref_embed(x_ncvt, p):
    scale = p["scale"][None, :, :, None]            # (1, C, V, 1)
    shift = p["shift"][None, :, :, None]
    xb = x_ncvt * scale + shift
    h = jnp.einsum("ncvt,hc->nhvt", xb, p["w1"]) + p["b1"].reshape(1, HID, 1, 1)
    h = jnp.maximum(h, 0.0)
    y = jnp.einsum("nhvt,oh->novt", h, p["w2"]) + p["b2"].reshape(1, C_OUT, 1, 1)
    return jnp.maximum(y, 0.0)


def ref_forward(inp, params_joint, params_tjpt, mode=2):
    N, T, VC = inp.shape
    C_raw = VC // V
    x = inp.reshape(N, T, V, C_raw)[..., :C_IN]
    x = jnp.transpose(x, (0, 3, 2, 1))              # (N, C, V, T)
    d = x[:, :, :, 1:] - x[:, :, :, :-1]
    t_jpt = jnp.concatenate([jnp.zeros_like(x[:, :, :, :1]), d], axis=-1)
    if mode == 0:
        return _ref_embed(x, params_joint)
    if mode == 1:
        return _ref_embed(t_jpt, params_tjpt)
    return _ref_embed(x, params_joint) + _ref_embed(t_jpt, params_tjpt)


# ---------------------------------------------------------------------------
if __name__ == "__main__":
    key = jax.random.PRNGKey(0)
    k_in, k_pj, k_pt = jax.random.split(key, 3)

    params_joint = make_embed_params(k_pj)
    params_tjpt = make_embed_params(k_pt)

    # small smoke-test shape: N=2 samples, T=8 frames, 25 joints x 3 coords
    N, T = 2, 8
    inp = jax.random.normal(k_in, (N, T, V * C_IN), jnp.float32)

    out = jax.block_until_ready(
        block_joint_input_forward(inp, params_joint, params_tjpt, mode=2))
    ref = ref_forward(inp, params_joint, params_tjpt, mode=2)
    assert out.shape == (N, C_OUT, V, T), out.shape
    assert jnp.allclose(out, ref, rtol=1e-3, atol=1e-3), float(jnp.max(jnp.abs(out - ref)))

    # also exercise the multi-sample-per-block (G > 1) path and modes 0 / 1
    inp2 = jax.random.normal(jax.random.PRNGKey(1), (8, 8, V * C_IN), jnp.float32)
    for mode in (2, 0, 1):
        o = jax.block_until_ready(
            block_joint_input_forward(inp2, params_joint, params_tjpt, mode=mode))
        r = ref_forward(inp2, params_joint, params_tjpt, mode=mode)
        assert jnp.allclose(o, r, rtol=1e-3, atol=1e-3), (
            mode, float(jnp.max(jnp.abs(o - r))))

    print("KERNEL_OK")
</pallas_src>

<mosaic_0001>
module attributes {stable_mosaic.version = 11 : i64} {
  func.func @kernel(%arg0: i32, %arg1: memref<1x8x200xf32, #tpu.memory_space<vmem>>, %arg2: memref<8x200xf32, #tpu.memory_space<vmem>>, %arg3: memref<8x200xf32, #tpu.memory_space<vmem>>, %arg4: memref<128x8xf32, #tpu.memory_space<vmem>>, %arg5: memref<128x1xf32, #tpu.memory_space<vmem>>, %arg6: memref<128x128xf32, #tpu.memory_space<vmem>>, %arg7: memref<128x1xf32, #tpu.memory_space<vmem>>, %arg8: memref<1x64x200xf32, #tpu.memory_space<vmem>>) attributes {dimension_semantics = [#tpu.dimension_semantics<parallel>], iteration_bounds = array<i64: 2>, scalar_prefetch = 0 : i64, scratch_operands = 0 : i64, tpu.core_type = #tpu.core_type<tc>, window_params = [{transform_indices = @transform_0, window_bounds = array<i64: 1, 8, 200>}, {pipeline_mode = #tpu.pipeline_mode<synchronous>, transform_indices = @transform_1, window_bounds = array<i64: 8, 200>}, {pipeline_mode = #tpu.pipeline_mode<synchronous>, transform_indices = @transform_2, window_bounds = array<i64: 8, 200>}, {pipeline_mode = #tpu.pipeline_mode<synchronous>, transform_indices = @transform_3, window_bounds = array<i64: 128, 8>}, {pipeline_mode = #tpu.pipeline_mode<synchronous>, transform_indices = @transform_4, window_bounds = array<i64: 128, 1>}, {pipeline_mode = #tpu.pipeline_mode<synchronous>, transform_indices = @transform_5, window_bounds = array<i64: 128, 128>}, {pipeline_mode = #tpu.pipeline_mode<synchronous>, transform_indices = @transform_6, window_bounds = array<i64: 128, 1>}, {transform_indices = @transform_7, window_bounds = array<i64: 1, 64, 200>}]} {
    %c0 = arith.constant 0 : index
    %c0_0 = arith.constant 0 : index
    %0 = vector.load %arg2[%c0, %c0_0] : memref<8x200xf32, #tpu.memory_space<vmem>>, vector<8x200xf32>
    %c0_1 = arith.constant 0 : index
    %c0_2 = arith.constant 0 : index
    %1 = vector.load %arg3[%c0_1, %c0_2] : memref<8x200xf32, #tpu.memory_space<vmem>>, vector<8x200xf32>
    %c0_3 = arith.constant 0 : index
    %c0_4 = arith.constant 0 : index
    %2 = vector.load %arg4[%c0_3, %c0_4] : memref<128x8xf32, #tpu.memory_space<vmem>>, vector<128x8xf32>
    %c0_5 = arith.constant 0 : index
    %c0_6 = arith.constant 0 : index
    %3 = vector.load %arg5[%c0_5, %c0_6] : memref<128x1xf32, #tpu.memory_space<vmem>>, vector<128x1xf32>
    %c0_7 = arith.constant 0 : index
    %c0_8 = arith.constant 0 : index
    %4 = vector.load %arg6[%c0_7, %c0_8] : memref<128x128xf32, #tpu.memory_space<vmem>>, vector<128x128xf32>
    %c0_9 = arith.constant 0 : index
    %c0_10 = arith.constant 0 : index
    %5 = vector.load %arg7[%c0_9, %c0_10] : memref<128x1xf32, #tpu.memory_space<vmem>>, vector<128x1xf32>
    %c0_11 = arith.constant 0 : index
    %c0_12 = arith.constant 0 : index
    %c0_13 = arith.constant 0 : index
    %6 = vector.load %arg1[%c0_11, %c0_12, %c0_13] : memref<1x8x200xf32, #tpu.memory_space<vmem>>, vector<1x8x200xf32>
    %7 = vector.shape_cast %6 : vector<1x8x200xf32> to vector<8x200xf32>
    %8 = arith.mulf %7, %0 : vector<8x200xf32>
    %9 = arith.addf %8, %1 : vector<8x200xf32>
    %cst = arith.constant dense<0.000000e+00> : vector<128x200xf32>
    %10 = tpu.matmul %2, %9, %cst {dimension_numbers = #tpu.dot_dimension_numbers<[1], [0], [0], [1], [0, 0, 1, 1], [], []>} : vector<128x8xf32>, vector<8x200xf32>, vector<128x200xf32> -> vector<128x200xf32>
    %11 = vector.broadcast %3 : vector<128x1xf32> to vector<128x200xf32>
    %12 = arith.addf %10, %11 : vector<128x200xf32>
    %cst_14 = arith.constant 0.000000e+00 : f32
    %13 = vector.broadcast %cst_14 : f32 to vector<128x200xf32>
    %14 = arith.maximumf %12, %13 : vector<128x200xf32>
    %cst_15 = arith.constant dense<0.000000e+00> : vector<128x200xf32>
    %15 = tpu.matmul %4, %14, %cst_15 {dimension_numbers = #tpu.dot_dimension_numbers<[1], [0], [0], [1], [0, 0, 1, 1], [], []>} : vector<128x128xf32>, vector<128x200xf32>, vector<128x200xf32> -> vector<128x200xf32>
    %16 = vector.broadcast %5 : vector<128x1xf32> to vector<128x200xf32>
    %17 = arith.addf %15, %16 : vector<128x200xf32>
    %cst_16 = arith.constant 0.000000e+00 : f32
    %18 = vector.broadcast %cst_16 : f32 to vector<128x200xf32>
    %19 = arith.maximumf %17, %18 : vector<128x200xf32>
    %20 = vector.extract_strided_slice %19 {offsets = [0, 0], sizes = [64, 200], strides = [1, 1]} : vector<128x200xf32> to vector<64x200xf32>
    %21 = vector.extract_strided_slice %19 {offsets = [64, 0], sizes = [64, 200], strides = [1, 1]} : vector<128x200xf32> to vector<64x200xf32>
    %22 = arith.addf %20, %21 : vector<64x200xf32>
    %c0_17 = arith.constant 0 : index
    %c0_18 = arith.constant 0 : index
    %c0_19 = arith.constant 0 : index
    %23 = vector.load %arg8[%c0_17, %c0_18, %c0_19] : memref<1x64x200xf32, #tpu.memory_space<vmem>>, vector<1x64x200xf32>
    %24 = vector.shape_cast %23 : vector<1x64x200xf32> to vector<64x200xf32>
    %25 = vector.shape_cast %22 : vector<64x200xf32> to vector<1x64x200xf32>
    tpu.vector_store %arg8[%c0_17, %c0_18, %c0_19], %25 {strides = array<i32>} : memref<1x64x200xf32, #tpu.memory_space<vmem>>, vector<1x64x200xf32>,
    return
  }
  func.func @transform_0(%arg0: i32) -> (i32, i32, i32) {
    %c0_i32 = arith.constant 0 : i32
    %c0_i32_0 = arith.constant 0 : i32
    %c0_i32_1 = arith.constant 0 : i32
    return %arg0, %c0_i32, %c0_i32_0 : i32, i32, i32
  }
  func.func @transform_1(%arg0: i32) -> (i32, i32) {
    %c0_i32 = arith.constant 0 : i32
    %c0_i32_0 = arith.constant 0 : i32
    %c0_i32_1 = arith.constant 0 : i32
    return %c0_i32, %c0_i32_0 : i32, i32
  }
  func.func @transform_2(%arg0: i32) -> (i32, i32) {
    %c0_i32 = arith.constant 0 : i32
    %c0_i32_0 = arith.constant 0 : i32
    %c0_i32_1 = arith.constant 0 : i32
    return %c0_i32, %c0_i32_0 : i32, i32
  }
  func.func @transform_3(%arg0: i32) -> (i32, i32) {
    %c0_i32 = arith.constant 0 : i32
    %c0_i32_0 = arith.constant 0 : i32
    %c0_i32_1 = arith.constant 0 : i32
    return %c0_i32, %c0_i32_0 : i32, i32
  }
  func.func @transform_4(%arg0: i32) -> (i32, i32) {
    %c0_i32 = arith.constant 0 : i32
    %c0_i32_0 = arith.constant 0 : i32
    %c0_i32_1 = arith.constant 0 : i32
    return %c0_i32, %c0_i32_0 : i32, i32
  }
  func.func @transform_5(%arg0: i32) -> (i32, i32) {
    %c0_i32 = arith.constant 0 : i32
    %c0_i32_0 = arith.constant 0 : i32
    %c0_i32_1 = arith.constant 0 : i32
    return %c0_i32, %c0_i32_0 : i32, i32
  }
  func.func @transform_6(%arg0: i32) -> (i32, i32) {
    %c0_i32 = arith.constant 0 : i32
    %c0_i32_0 = arith.constant 0 : i32
    %c0_i32_1 = arith.constant 0 : i32
    return %c0_i32, %c0_i32_0 : i32, i32
  }
  func.func @transform_7(%arg0: i32) -> (i32, i32, i32) {
    %c0_i32 = arith.constant 0 : i32
    %c0_i32_0 = arith.constant 0 : i32
    %c0_i32_1 = arith.constant 0 : i32
    return %arg0, %c0_i32, %c0_i32_0 : i32, i32, i32
  }
}

</mosaic_0001>

<llo_original>
// kernel: tpu_custom_call.1
$region0: #{tpu_custom_call.1}
  #allocation0 [shape = 'u32[]', space=smem, size = 0x4, offset = 0x4, fixed_abs, tag = 'smem constant byte address 0x4 - core index']
  #allocation1 [shape = 'u32[144,128]{1,0:T(1,128)}', space=vmem, size = 0x12000, scoped, tag = 'internal scratch']
  %s0 = inlined_call_operand.vmem [shape: f32[2,8,200], index: 0, kind: input, shape index: {}]
  %s1 = inlined_call_operand.vmem [shape: f32[8,200], index: 1, kind: input, shape index: {}]
  %s2 = inlined_call_operand.vmem [shape: f32[8,200], index: 2, kind: input, shape index: {}]
  %s3 = inlined_call_operand.vmem [shape: f32[128,8], index: 3, kind: input, shape index: {}]
  %s4 = inlined_call_operand.vmem [shape: f32[128,1], index: 4, kind: input, shape index: {}]
  %s5 = inlined_call_operand.vmem [shape: f32[128,128], index: 5, kind: input, shape index: {}]
  %s6 = inlined_call_operand.vmem [shape: f32[128,1], index: 6, kind: input, shape index: {}]
  %s7 = inlined_call_operand.hbm [shape: f32[2,64,200], index: 7, kind: output, shape index: {}]
  %s8 = sld [smem:[#allocation0]]
  $region61: #{tpu_custom_call.1} parent=0
    _
  %s10 = ssub.s32 1, %s8
  %s11 = scalar_select 0, %s10, %s8
  $region1: #{tpu_custom_call.1} parent=0
    #allocation2 [shape = 'u8[131072]{0}', space=vmem, size = 0x20000, scoped, tag = 'output window, operand 0']
    #allocation3 [shape = 's32[2]{0}', space=sflag, size = 0x8, scoped, tag = 'scoped memory for tpu_custom_call.1']
    %12 = vsyncpa [#allocation3], 0
    %s13 = scalar_lea.sflag [#allocation3], 1
    %14 = vsyncpa %s13, 0
    loop: start=0, step=1, limit=4
    $region2: #{tpu_custom_call.1} parent=1 // loop_pre_header
      _
    $region3: #{tpu_custom_call.1} parent=1 // loop_header
      %s16 = sphi 0, %s20
      %p17 = scmp.ge.s32.totalorder %s16, 4
      %s26 = sphi 0, %s28
      %s29 = sphi 0, %s26
      %s30 = sphi 0, %s29
      %s46 = sphi 0, %s30
      %s50 = sphi 0, %s50
      %s52 = sphi 0, %s50
      %s53 = sphi 0, %s52
      %s67 = sphi 0, %s53
      %s71 = sphi 0, %s71
      %s73 = sphi 0, %s71
      %s74 = sphi 0, %s73
      %s88 = sphi 0, %s74
      %s92 = sphi 0, %s92
      %s94 = sphi 0, %s92
      %s95 = sphi 0, %s94
      %s109 = sphi 0, %s95
      %s113 = sphi 0, %s113
      %s115 = sphi 0, %s113
      %s116 = sphi 0, %s115
      %s130 = sphi 0, %s116
      %s134 = sphi 0, %s134
      %s136 = sphi 0, %s134
      %s137 = sphi 0, %s136
      %s151 = sphi 0, %s137
      %s155 = sphi 0, %s155
      %s157 = sphi 0, %s155
      %s158 = sphi 0, %s157
      %s172 = sphi 0, %s158
      %s178 = sphi 0, %s180
      %s181 = sphi 0, %s178
      %s182 = sphi 0, %s181
      %s198 = sphi 0, %s182
    $region4: #{tpu_custom_call.1} parent=1 // loop_header_branch
      %19 = sbr.rel (%p17) target = $region8
    $region5: #{tpu_custom_call.1} parent=1 // loop_body
      %s21 = ssub.s32 %s16, 1
      %s22 = ssub.s32 %s16, 2
      %s23 = sadd.s32 %s16, 1
      %s24 = ssub.s32 %s16, %s23
      %p25 = scmp.eq.s32.totalorder %s24, 0
      %s27 = sadd.s32 %s26, 1
      %s28 = scalar_select %p25, %s26, %s27
      %p31 = pneg %p25
      %p32 = scmp.eq.s32.totalorder %s16, 1
      %p33 = por %p31, %p32
      %p34 = scmp.ne.s32.totalorder %s26, %s29
      %p35 = scmp.eq.s32.totalorder %s16, 0
      %p36 = por %p34, %p35
      %p37 = scmp.ne.s32.totalorder %s26, %s29
      %p38 = scmp.eq.s32.totalorder %s21, 1
      %p39 = por %p37, %p38
      %p40 = scmp.ne.s32.totalorder %s29, %s30
      %p41 = scmp.eq.s32.totalorder %s21, 0
      %p42 = por %p40, %p41
      %p43 = scmp.ne.s32.totalorder %s29, %s30
      %p44 = scmp.eq.s32.totalorder %s22, 1
      %p45 = por %p43, %p44
      %p47 = scmp.ne.s32.totalorder %s30, %s46
      %p48 = scmp.eq.s32.totalorder %s22, 0
      %p49 = por %p47, %p48
      %s51 = sadd.s32 %s50, 1
      %p54 = scmp.eq.s32.totalorder %s16, 1
      %p55 = scmp.ne.s32.totalorder %s50, %s52
      %p56 = scmp.eq.s32.totalorder %s16, 0
      %p57 = por %p55, %p56
      %p58 = scmp.ne.s32.totalorder %s50, %s52
      %p59 = scmp.eq.s32.totalorder %s21, 1
      %p60 = por %p58, %p59
      %p61 = scmp.ne.s32.totalorder %s52, %s53
      %p62 = scmp.eq.s32.totalorder %s21, 0
      %p63 = por %p61, %p62
      %p64 = scmp.ne.s32.totalorder %s52, %s53
      %p65 = scmp.eq.s32.totalorder %s22, 1
      %p66 = por %p64, %p65
      %p68 = scmp.ne.s32.totalorder %s53, %s67
      %p69 = scmp.eq.s32.totalorder %s22, 0
      %p70 = por %p68, %p69
      %s72 = sadd.s32 %s71, 1
      %p75 = scmp.eq.s32.totalorder %s16, 1
      %p76 = scmp.ne.s32.totalorder %s71, %s73
      %p77 = scmp.eq.s32.totalorder %s16, 0
      %p78 = por %p76, %p77
      %p79 = scmp.ne.s32.totalorder %s71, %s73
      %p80 = scmp.eq.s32.totalorder %s21, 1
      %p81 = por %p79, %p80
      %p82 = scmp.ne.s32.totalorder %s73, %s74
      %p83 = scmp.eq.s32.totalorder %s21, 0
      %p84 = por %p82, %p83
      %p85 = scmp.ne.s32.totalorder %s73, %s74
      %p86 = scmp.eq.s32.totalorder %s22, 1
      %p87 = por %p85, %p86
      %p89 = scmp.ne.s32.totalorder %s74, %s88
      %p90 = scmp.eq.s32.totalorder %s22, 0
      %p91 = por %p89, %p90
      %s93 = sadd.s32 %s92, 1
      %p96 = scmp.eq.s32.totalorder %s16, 1
      %p97 = scmp.ne.s32.totalorder %s92, %s94
      %p98 = scmp.eq.s32.totalorder %s16, 0
      %p99 = por %p97, %p98
      %p100 = scmp.ne.s32.totalorder %s92, %s94
      %p101 = scmp.eq.s32.totalorder %s21, 1
      %p102 = por %p100, %p101
      %p103 = scmp.ne.s32.totalorder %s94, %s95
      %p104 = scmp.eq.s32.totalorder %s21, 0
      %p105 = por %p103, %p104
      %p106 = scmp.ne.s32.totalorder %s94, %s95
      %p107 = scmp.eq.s32.totalorder %s22, 1
      %p108 = por %p106, %p107
      %p110 = scmp.ne.s32.totalorder %s95, %s109
      %p111 = scmp.eq.s32.totalorder %s22, 0
      %p112 = por %p110, %p111
      %s114 = sadd.s32 %s113, 1
      %p117 = scmp.eq.s32.totalorder %s16, 1
      %p118 = scmp.ne.s32.totalorder %s113, %s115
      %p119 = scmp.eq.s32.totalorder %s16, 0
      %p120 = por %p118, %p119
      %p121 = scmp.ne.s32.totalorder %s113, %s115
      %p122 = scmp.eq.s32.totalorder %s21, 1
      %p123 = por %p121, %p122
      %p124 = scmp.ne.s32.totalorder %s115, %s116
      %p125 = scmp.eq.s32.totalorder %s21, 0
      %p126 = por %p124, %p125
      %p127 = scmp.ne.s32.totalorder %s115, %s116
      %p128 = scmp.eq.s32.totalorder %s22, 1
      %p129 = por %p127, %p128
      %p131 = scmp.ne.s32.totalorder %s116, %s130
      %p132 = scmp.eq.s32.totalorder %s22, 0
      %p133 = por %p131, %p132
      %s135 = sadd.s32 %s134, 1
      %p138 = scmp.eq.s32.totalorder %s16, 1
      %p139 = scmp.ne.s32.totalorder %s134, %s136
      %p140 = scmp.eq.s32.totalorder %s16, 0
      %p141 = por %p139, %p140
      %p142 = scmp.ne.s32.totalorder %s134, %s136
      %p143 = scmp.eq.s32.totalorder %s21, 1
      %p144 = por %p142, %p143
      %p145 = scmp.ne.s32.totalorder %s136, %s137
      %p146 = scmp.eq.s32.totalorder %s21, 0
      %p147 = por %p145, %p146
      %p148 = scmp.ne.s32.totalorder %s136, %s137
      %p149 = scmp.eq.s32.totalorder %s22, 1
      %p150 = por %p148, %p149
      %p152 = scmp.ne.s32.totalorder %s137, %s151
      %p153 = scmp.eq.s32.totalorder %s22, 0
      %p154 = por %p152, %p153
      %s156 = sadd.s32 %s155, 1
      %p159 = scmp.eq.s32.totalorder %s16, 1
      %p160 = scmp.ne.s32.totalorder %s155, %s157
      %p161 = scmp.eq.s32.totalorder %s16, 0
      %p162 = por %p160, %p161
      %p163 = scmp.ne.s32.totalorder %s155, %s157
      %p164 = scmp.eq.s32.totalorder %s21, 1
      %p165 = por %p163, %p164
      %p166 = scmp.ne.s32.totalorder %s157, %s158
      %p167 = scmp.eq.s32.totalorder %s21, 0
      %p168 = por %p166, %p167
      %p169 = scmp.ne.s32.totalorder %s157, %s158
      %p170 = scmp.eq.s32.totalorder %s22, 1
      %p171 = por %p169, %p170
      %p173 = scmp.ne.s32.totalorder %s158, %s172
      %p174 = scmp.eq.s32.totalorder %s22, 0
      %p175 = por %p173, %p174
      %s176 = ssub.s32 %s16, %s23
      %p177 = scmp.eq.s32.totalorder %s176, 0
      %s179 = sadd.s32 %s178, 1
      %s180 = scalar_select %p177, %s178, %s179
      %p183 = pneg %p177
      %p184 = scmp.eq.s32.totalorder %s16, 1
      %p185 = por %p183, %p184
      %p186 = scmp.ne.s32.totalorder %s178, %s181
      %p187 = scmp.eq.s32.totalorder %s16, 0
      %p188 = por %p186, %p187
      %p189 = scmp.ne.s32.totalorder %s178, %s181
      %p190 = scmp.eq.s32.totalorder %s21, 1
      %p191 = por %p189, %p190
      %p192 = scmp.ne.s32.totalorder %s181, %s182
      %p193 = scmp.eq.s32.totalorder %s21, 0
      %p194 = por %p192, %p193
      %p195 = scmp.ne.s32.totalorder %s181, %s182
      %p196 = scmp.eq.s32.totalorder %s22, 1
      %p197 = por %p195, %p196
      %p199 = scmp.ne.s32.totalorder %s182, %s198
      %p200 = scmp.eq.s32.totalorder %s22, 0
      %p201 = por %p199, %p200
      %p202 = scmp.le.s32.totalorder 1, %s16
      %p203 = scmp.lt.s32.totalorder %s16, 3
      %p204 = pnand %p202, %p203
      %p205 = pneg %p204
      // Predicated region
      $region9: #{tpu_custom_call.1} parent=5 // pred_check
        _
      $region10: #{tpu_custom_call.1} parent=5 // pred_check_branch
        %207 = sbr.rel (%p204) target = $region12
      $region11: #{tpu_custom_call.1} parent=5 // pred_region
        %s208 = ssub.s32 %s16, 1
        // Predicated region
        $region13: #{tpu_custom_call.1} parent=11 // pred_check
          %p209 = pneg %p63
        $region14: #{tpu_custom_call.1} parent=11 // pred_check_branch
          %211 = sbr.rel (%p209) target = $region16
        $region15: #{tpu_custom_call.1} parent=11 // pred_region
          _
        $region16: #{tpu_custom_call.1} parent=11 // pred_fallthru
          _
        // Predicated region
        $region17: #{tpu_custom_call.1} parent=11 // pred_check
          %p212 = pneg %p84
        $region18: #{tpu_custom_call.1} parent=11 // pred_check_branch
          %214 = sbr.rel (%p212) target = $region20
        $region19: #{tpu_custom_call.1} parent=11 // pred_region
          _
        $region20: #{tpu_custom_call.1} parent=11 // pred_fallthru
          _
        // Predicated region
        $region21: #{tpu_custom_call.1} parent=11 // pred_check
          %p215 = pneg %p105
        $region22: #{tpu_custom_call.1} parent=11 // pred_check_branch
          %217 = sbr.rel (%p215) target = $region24
        $region23: #{tpu_custom_call.1} parent=11 // pred_region
          _
        $region24: #{tpu_custom_call.1} parent=11 // pred_fallthru
          _
        // Predicated region
        $region25: #{tpu_custom_call.1} parent=11 // pred_check
          %p218 = pneg %p126
        $region26: #{tpu_custom_call.1} parent=11 // pred_check_branch
          %220 = sbr.rel (%p218) target = $region28
        $region27: #{tpu_custom_call.1} parent=11 // pred_region
          _
        $region28: #{tpu_custom_call.1} parent=11 // pred_fallthru
          _
        // Predicated region
        $region29: #{tpu_custom_call.1} parent=11 // pred_check
          %p221 = pneg %p147
        $region30: #{tpu_custom_call.1} parent=11 // pred_check_branch
          %223 = sbr.rel (%p221) target = $region32
        $region31: #{tpu_custom_call.1} parent=11 // pred_region
          _
        $region32: #{tpu_custom_call.1} parent=11 // pred_fallthru
          _
        // Predicated region
        $region33: #{tpu_custom_call.1} parent=11 // pred_check
          %p224 = pneg %p168
        $region34: #{tpu_custom_call.1} parent=11 // pred_check_branch
          %226 = sbr.rel (%p224) target = $region36
        $region35: #{tpu_custom_call.1} parent=11 // pred_region
          _
        $region36: #{tpu_custom_call.1} parent=11 // pred_fallthru
          _
      $region12: #{tpu_custom_call.1} parent=5 // pred_fallthru
        _
      %p227 = scmp.lt.s32.totalorder %s16, 2
      // Predicated region
      $region37: #{tpu_custom_call.1} parent=5 // pred_check
        %p228 = pneg %p227
      $region38: #{tpu_custom_call.1} parent=5 // pred_check_branch
        %230 = sbr.rel (%p228) target = $region40
      $region39: #{tpu_custom_call.1} parent=5 // pred_region
        // Predicated region
        $region41: #{tpu_custom_call.1} parent=39 // pred_check
          %p231 = pneg %p36
        $region42: #{tpu_custom_call.1} parent=39 // pred_check_branch
          %233 = sbr.rel (%p231) target = $region44
        $region43: #{tpu_custom_call.1} parent=39 // pred_region
          %p234 = scmp.lt.s32.totalorder %s16, 1
          %s235 = scalar_select %p234, %s16, 1
          %s236 = smul.addr %s235, 2
          %s237 = smul.addr %s236, 8
          %s238 = scalar_lea.vmem %s0, %s237
        $region44: #{tpu_custom_call.1} parent=39 // pred_fallthru
          _
      $region40: #{tpu_custom_call.1} parent=5 // pred_fallthru
        _
      %p239 = scmp.le.s32.totalorder 1, %s16
      %p240 = scmp.lt.s32.totalorder %s16, 3
      %p241 = pnand %p239, %p240
      %p242 = pneg %p241
      // Predicated region
      $region45: #{tpu_custom_call.1} parent=5 // pred_check
        _
      $region46: #{tpu_custom_call.1} parent=5 // pred_check_branch
        %244 = sbr.rel (%p241) target = $region48
      $region47: #{tpu_custom_call.1} parent=5 // pred_region
        %s245 = ssub.s32 %s16, 1
        %p246 = scmp.lt.s32.totalorder %s21, 1
        %s247 = scalar_select %p246, %s21, 1
        %s248 = smul.addr %s247, 2
        %s249 = smul.addr %s248, 8
        %s250 = scalar_lea.vmem %s0, %s249
        %p251 = pneg %p42
        %p252 = pneg %p39
        %p253 = pneg %p63
        %p254 = pneg %p60
        %p255 = pneg %p84
        %p256 = pneg %p81
        %p257 = pneg %p105
        %p258 = pneg %p102
        %p259 = pneg %p126
        %p260 = pneg %p123
        %p261 = pneg %p147
        %p262 = pneg %p144
        %p263 = pneg %p168
        %p264 = pneg %p165
        %p265 = pneg %p194
        %p266 = pneg %p191
        %s267 = sand.u32 %s181, 1
        %s268 = scalar_lea.sflag [#allocation3], %s267
        %s269 = sand.u32 %s181, 1
        %s270 = smul.addr %s269, 128
        %s271 = scalar_lea.vmem [#allocation2], %s270
        %p272 = scmp.lt.s32.totalorder %s21, 1
        %s273 = scalar_select %p272, %s21, 1
        %s274 = smul.addr %s273, 2
        %s275 = smul.addr %s274, 8
        %s276 = scalar_lea.vmem %s0, %s275
        %v277 = vld [vmem:[%s1] sm:$0xff]
        %v278 = vld [vmem:[%s1 + $0x8] sm:$0xff]
        %v279 = vld [vmem:[%s2] sm:$0xff]
        %v280 = vld [vmem:[%s2 + $0x8] sm:$0xff]
        %v281 = vld [vmem:[%s3] sm:$0xff]
        %v282 = vld [vmem:[%s3 + $0x8] sm:$0xff]
        %v283 = vld [vmem:[%s3 + $0x10] sm:$0xff]
        %v284 = vld [vmem:[%s3 + $0x18] sm:$0xff]
        %v285 = vld [vmem:[%s3 + $0x20] sm:$0xff]
        %v286 = vld [vmem:[%s3 + $0x28] sm:$0xff]
        %v287 = vld [vmem:[%s3 + $0x30] sm:$0xff]
        %v288 = vld [vmem:[%s3 + $0x38] sm:$0xff]
        %v289 = vld [vmem:[%s3 + $0x40] sm:$0xff]
        %v290 = vld [vmem:[%s3 + $0x48] sm:$0xff]
        %v291 = vld [vmem:[%s3 + $0x50] sm:$0xff]
        %v292 = vld [vmem:[%s3 + $0x58] sm:$0xff]
        %v293 = vld [vmem:[%s3 + $0x60] sm:$0xff]
        %v294 = vld [vmem:[%s3 + $0x68] sm:$0xff]
        %v295 = vld [vmem:[%s3 + $0x70] sm:$0xff]
        %v296 = vld [vmem:[%s3 + $0x78] sm:$0xff]
        %v297 = vld [vmem:[%s4] sm:$0xff]
        %v298 = vld [vmem:[%s4 + $0x8] sm:$0xff]
        %v299 = vld [vmem:[%s4 + $0x10] sm:$0xff]
        %v300 = vld [vmem:[%s4 + $0x18] sm:$0xff]
        %v301 = vld [vmem:[%s4 + $0x20] sm:$0xff]
        %v302 = vld [vmem:[%s4 + $0x28] sm:$0xff]
        %v303 = vld [vmem:[%s4 + $0x30] sm:$0xff]
        %v304 = vld [vmem:[%s4 + $0x38] sm:$0xff]
        %v305 = vld [vmem:[%s4 + $0x40] sm:$0xff]
        %v306 = vld [vmem:[%s4 + $0x48] sm:$0xff]
        %v307 = vld [vmem:[%s4 + $0x50] sm:$0xff]
        %v308 = vld [vmem:[%s4 + $0x58] sm:$0xff]
        %v309 = vld [vmem:[%s4 + $0x60] sm:$0xff]
        %v310 = vld [vmem:[%s4 + $0x68] sm:$0xff]
        %v311 = vld [vmem:[%s4 + $0x70] sm:$0xff]
        %v312 = vld [vmem:[%s4 + $0x78] sm:$0xff]
        %v313 = vld [vmem:[%s5] sm:$0xff]
        %v314 = vld [vmem:[%s5 + $0x8] sm:$0xff]
        %v315 = vld [vmem:[%s5 + $0x10] sm:$0xff]
        %v316 = vld [vmem:[%s5 + $0x18] sm:$0xff]
        %v317 = vld [vmem:[%s5 + $0x20] sm:$0xff]
        %v318 = vld [vmem:[%s5 + $0x28] sm:$0xff]
        %v319 = vld [vmem:[%s5 + $0x30] sm:$0xff]
        %v320 = vld [vmem:[%s5 + $0x38] sm:$0xff]
        %v321 = vld [vmem:[%s5 + $0x40] sm:$0xff]
        %v322 = vld [vmem:[%s5 + $0x48] sm:$0xff]
        %v323 = vld [vmem:[%s5 + $0x50] sm:$0xff]
        %v324 = vld [vmem:[%s5 + $0x58] sm:$0xff]
        %v325 = vld [vmem:[%s5 + $0x60] sm:$0xff]
        %v326 = vld [vmem:[%s5 + $0x68] sm:$0xff]
        %v327 = vld [vmem:[%s5 + $0x70] sm:$0xff]
        %v328 = vld [vmem:[%s5 + $0x78] sm:$0xff]
        %v329 = vld [vmem:[%s6] sm:$0xff]
        %v330 = vld [vmem:[%s6 + $0x8] sm:$0xff]
        %v331 = vld [vmem:[%s6 + $0x10] sm:$0xff]
        %v332 = vld [vmem:[%s6 + $0x18] sm:$0xff]
        %v333 = vld [vmem:[%s6 + $0x20] sm:$0xff]
        %v334 = vld [vmem:[%s6 + $0x28] sm:$0xff]
        %v335 = vld [vmem:[%s6 + $0x30] sm:$0xff]
        %v336 = vld [vmem:[%s6 + $0x38] sm:$0xff]
        %v337 = vld [vmem:[%s6 + $0x40] sm:$0xff]
        %v338 = vld [vmem:[%s6 + $0x48] sm:$0xff]
        %v339 = vld [vmem:[%s6 + $0x50] sm:$0xff]
        %v340 = vld [vmem:[%s6 + $0x58] sm:$0xff]
        %v341 = vld [vmem:[%s6 + $0x60] sm:$0xff]
        %v342 = vld [vmem:[%s6 + $0x68] sm:$0xff]
        %v343 = vld [vmem:[%s6 + $0x70] sm:$0xff]
        %v344 = vld [vmem:[%s6 + $0x78] sm:$0xff]
        %v345 = vld [vmem:[%s276] sm:$0xff]
        %v346 = vld [vmem:[%s276 + $0x8] sm:$0xff]
        %v347 = vmul.f32 %v345, %v277
        %v348 = vmul.f32 %v346, %v278
        %v349 = vadd.f32 %v347, %v279
        %v350 = vadd.f32 %v348, %v280
        %352 = vset.pattern.permute.xlu0 0
        %353 = vperm.xlu0 %352, %v297
        %v354 = vpop.permute.xlu0 %353
        %357 = vset.pattern.permute.xlu0 0
        %358 = vperm.xlu0 %357, %v298
        %v359 = vpop.permute.xlu0 %358
        %362 = vset.pattern.permute.xlu0 0
        %363 = vperm.xlu0 %362, %v299
        %v364 = vpop.permute.xlu0 %363
        %367 = vset.pattern.permute.xlu0 0
        %368 = vperm.xlu0 %367, %v300
        %v369 = vpop.permute.xlu0 %368
        %372 = vset.pattern.permute.xlu0 0
        %373 = vperm.xlu0 %372, %v301
        %v374 = vpop.permute.xlu0 %373
        %377 = vset.pattern.permute.xlu0 0
        %378 = vperm.xlu0 %377, %v302
        %v379 = vpop.permute.xlu0 %378
        %382 = vset.pattern.permute.xlu0 0
        %383 = vperm.xlu0 %382, %v303
        %v384 = vpop.permute.xlu0 %383
        %387 = vset.pattern.permute.xlu0 0
        %388 = vperm.xlu0 %387, %v304
        %v389 = vpop.permute.xlu0 %388
        %392 = vset.pattern.permute.xlu0 0
        %393 = vperm.xlu0 %392, %v305
        %v394 = vpop.permute.xlu0 %393
        %397 = vset.pattern.permute.xlu0 0
        %398 = vperm.xlu0 %397, %v306
        %v399 = vpop.permute.xlu0 %398
        %402 = vset.pattern.permute.xlu0 0
        %403 = vperm.xlu0 %402, %v307
        %v404 = vpop.permute.xlu0 %403
        %407 = vset.pattern.permute.xlu0 0
        %408 = vperm.xlu0 %407, %v308
        %v409 = vpop.permute.xlu0 %408
        %412 = vset.pattern.permute.xlu0 0
        %413 = vperm.xlu0 %412, %v309
        %v414 = vpop.permute.xlu0 %413
        %417 = vset.pattern.permute.xlu0 0
        %418 = vperm.xlu0 %417, %v310
        %v419 = vpop.permute.xlu0 %418
        %422 = vset.pattern.permute.xlu0 0
        %423 = vperm.xlu0 %422, %v311
        %v424 = vpop.permute.xlu0 %423
        %427 = vset.pattern.permute.xlu0 0
        %428 = vperm.xlu0 %427, %v312
        %v429 = vpop.permute.xlu0 %428
        %vm431 = vcmask 64512
        %v433 = vsel %vm431, %v281, 0
        %v436 = vsel %vm431, %v282, 0
        %v439 = vsel %vm431, %v283, 0
        %v442 = vsel %vm431, %v284, 0
        %v445 = vsel %vm431, %v285, 0
        %v448 = vsel %vm431, %v286, 0
        %v451 = vsel %vm431, %v287, 0
        %v454 = vsel %vm431, %v288, 0
        %v457 = vsel %vm431, %v289, 0
        %v460 = vsel %vm431, %v290, 0
        %v463 = vsel %vm431, %v291, 0
        %v466 = vsel %vm431, %v292, 0
        %v469 = vsel %vm431, %v293, 0
        %v472 = vsel %vm431, %v294, 0
        %v475 = vsel %vm431, %v295, 0
        %v478 = vsel %vm431, %v296, 0
        %480 = vmatprep.subr.mxu0 0.0
        %481 = vmatpush1.msra.mxu0 0.0
        %482 = vmatprep.subr.mxu0 0.0
        %483 = vmatpush1.msra.mxu0 0.0
        %484 = vmatprep.subr.mxu0 0.0
        %485 = vmatpush1.msra.mxu0 0.0
        %486 = vmatprep.subr.mxu0 0.0
        %487 = vmatpush1.msra.mxu0 0.0
        %488 = vmatprep.subr.mxu0 0.0
        %489 = vmatpush1.msra.mxu0 0.0
        %490 = vmatprep.subr.mxu0 0.0
        %491 = vmatpush1.msra.mxu0 0.0
        %492 = vmatprep.subr.mxu0 0.0
        %493 = vmatpush1.msra.mxu0 0.0
        %494 = vmatprep.subr.mxu0 0.0
        %495 = vmatpush1.msra.mxu0 0.0
        %496 = vmatprep.subr.mxu0 0.0
        %497 = vmatpush1.msra.mxu0 0.0
        %498 = vmatprep.subr.mxu0 0.0
        %499 = vmatpush1.msra.mxu0 0.0
        %500 = vmatprep.subr.mxu0 0.0
        %501 = vmatpush1.msra.mxu0 0.0
        %502 = vmatprep.subr.mxu0 0.0
        %503 = vmatpush1.msra.mxu0 0.0
        %504 = vmatprep.subr.mxu0 0.0
        %505 = vmatpush1.msra.mxu0 0.0
        %506 = vmatprep.subr.mxu0 0.0
        %507 = vmatpush1.msra.mxu0 0.0
        %508 = vmatprep.subr.mxu0 0.0
        %509 = vmatpush1.msra.mxu0 0.0
        %510 = vmatprep.subr.mxu0 %v350
        %511 = vmatpush1.msra.mxu0 %v349
        %512 = vmatprep.subr.mxu0 0.0
        %513 = vmatpush2.msra.mxu0 0.0
        %514 = vmatprep.subr.mxu0 0.0
        %515 = vmatpush2.msra.mxu0 0.0
        %516 = vmatprep.subr.mxu0 0.0
        %517 = vmatpush2.msra.mxu0 0.0
        %518 = vmatprep.subr.mxu0 0.0
        %519 = vmatpush2.msra.mxu0 0.0
        %520 = vmatprep.subr.mxu0 0.0
        %521 = vmatpush2.msra.mxu0 0.0
        %522 = vmatprep.subr.mxu0 0.0
        %523 = vmatpush2.msra.mxu0 0.0
        %524 = vmatprep.subr.mxu0 0.0
        %525 = vmatpush2.msra.mxu0 0.0
        %526 = vmatprep.subr.mxu0 0.0
        %527 = vmatpush2.msra.mxu0 0.0
        %528 = vmatprep.subr.mxu0 0.0
        %529 = vmatpush2.msra.mxu0 0.0
        %530 = vmatprep.subr.mxu0 0.0
        %531 = vmatpush2.msra.mxu0 0.0
        %532 = vmatprep.subr.mxu0 0.0
        %533 = vmatpush2.msra.mxu0 0.0
        %534 = vmatprep.subr.mxu0 0.0
        %535 = vmatpush2.msra.mxu0 0.0
        %536 = vmatprep.subr.mxu0 0.0
        %537 = vmatpush2.msra.mxu0 0.0
        %538 = vmatprep.subr.mxu0 0.0
        %539 = vmatpush2.msra.mxu0 0.0
        %540 = vmatprep.subr.mxu0 0.0
        %541 = vmatpush2.msra.mxu0 0.0
        %542 = vmatprep.subr.mxu0 0.0
        %543 = vmatpush2.msra.mxu0 0.0
        %544 = vmatprep.mubr.f32.mxu0 0.0
        %545 = vmatmul.mubr.f32.gmra.mxu0 %v433
        %v546 = vpop.f32.mrf.mxu0
        %v547 = vadd.f32 %v354, %v546
        %v548 = vpop.f32.mrf.mxu0
        %v549 = vadd.f32 %v354, %v548
        %550 = vmatprep.mubr.f32.mxu0 0.0
        %551 = vmatmul.mubr.f32.gmra.mxu0 %v436
        %v552 = vpop.f32.mrf.mxu0
        %v553 = vadd.f32 %v359, %v552
        %v554 = vpop.f32.mrf.mxu0
        %v555 = vadd.f32 %v359, %v554
        %556 = vmatprep.mubr.f32.mxu0 0.0
        %557 = vmatmul.mubr.f32.gmra.mxu0 %v439
        %v558 = vpop.f32.mrf.mxu0
        %v559 = vadd.f32 %v364, %v558
        %v560 = vpop.f32.mrf.mxu0
        %v561 = vadd.f32 %v364, %v560
        %562 = vmatprep.mubr.f32.mxu0 0.0
        %563 = vmatmul.mubr.f32.gmra.mxu0 %v442
        %v564 = vpop.f32.mrf.mxu0
        %v565 = vadd.f32 %v369, %v564
        %v566 = vpop.f32.mrf.mxu0
        %v567 = vadd.f32 %v369, %v566
        %568 = vmatprep.mubr.f32.mxu0 0.0
        %569 = vmatmul.mubr.f32.gmra.mxu0 %v445
        %v570 = vpop.f32.mrf.mxu0
        %v571 = vadd.f32 %v374, %v570
        %v572 = vpop.f32.mrf.mxu0
        %v573 = vadd.f32 %v374, %v572
        %574 = vmatprep.mubr.f32.mxu0 0.0
        %575 = vmatmul.mubr.f32.gmra.mxu0 %v448
        %v576 = vpop.f32.mrf.mxu0
        %v577 = vadd.f32 %v379, %v576
        %v578 = vpop.f32.mrf.mxu0
        %v579 = vadd.f32 %v379, %v578
        %580 = vmatprep.mubr.f32.mxu0 0.0
        %581 = vmatmul.mubr.f32.gmra.mxu0 %v451
        %v582 = vpop.f32.mrf.mxu0
        %v583 = vadd.f32 %v384, %v582
        %v584 = vpop.f32.mrf.mxu0
        %v585 = vadd.f32 %v384, %v584
        %586 = vmatprep.mubr.f32.mxu0 0.0
        %587 = vmatmul.mubr.f32.gmra.mxu0 %v454
        %v588 = vpop.f32.mrf.mxu0
        %v589 = vadd.f32 %v389, %v588
        %v590 = vpop.f32.mrf.mxu0
        %v591 = vadd.f32 %v389, %v590
        %592 = vmatprep.mubr.f32.mxu0 0.0
        %593 = vmatmul.mubr.f32.gmra.mxu0 %v457
        %v594 = vpop.f32.mrf.mxu0
        %v595 = vadd.f32 %v394, %v594
        %v596 = vpop.f32.mrf.mxu0
        %v597 = vadd.f32 %v394, %v596
        %598 = vmatprep.mubr.f32.mxu0 0.0
        %599 = vmatmul.mubr.f32.gmra.mxu0 %v460
        %v600 = vpop.f32.mrf.mxu0
        %v601 = vadd.f32 %v399, %v600
        %v602 = vpop.f32.mrf.mxu0
        %v603 = vadd.f32 %v399, %v602
        %604 = vmatprep.mubr.f32.mxu0 0.0
        %605 = vmatmul.mubr.f32.gmra.mxu0 %v463
        %v606 = vpop.f32.mrf.mxu0
        %v607 = vadd.f32 %v404, %v606
        %v608 = vpop.f32.mrf.mxu0
        %v609 = vadd.f32 %v404, %v608
        %610 = vmatprep.mubr.f32.mxu0 0.0
        %611 = vmatmul.mubr.f32.gmra.mxu0 %v466
        %v612 = vpop.f32.mrf.mxu0
        %v613 = vadd.f32 %v409, %v612
        %v614 = vpop.f32.mrf.mxu0
        %v615 = vadd.f32 %v409, %v614
        %616 = vmatprep.mubr.f32.mxu0 0.0
        %617 = vmatmul.mubr.f32.gmra.mxu0 %v469
        %v618 = vpop.f32.mrf.mxu0
        %v619 = vadd.f32 %v414, %v618
        %v620 = vpop.f32.mrf.mxu0
        %v621 = vadd.f32 %v414, %v620
        %622 = vmatprep.mubr.f32.mxu0 0.0
        %623 = vmatmul.mubr.f32.gmra.mxu0 %v472
        %v624 = vpop.f32.mrf.mxu0
        %v625 = vadd.f32 %v419, %v624
        %v626 = vpop.f32.mrf.mxu0
        %v627 = vadd.f32 %v419, %v626
        %628 = vmatprep.mubr.f32.mxu0 0.0
        %629 = vmatmul.mubr.f32.gmra.mxu0 %v475
        %v630 = vpop.f32.mrf.mxu0
        %v631 = vadd.f32 %v424, %v630
        %v632 = vpop.f32.mrf.mxu0
        %v633 = vadd.f32 %v424, %v632
        %634 = vmatprep.mubr.f32.mxu0 0.0
        %635 = vmatmul.mubr.f32.gmra.mxu0 %v478
        %v636 = vpop.f32.mrf.mxu0
        %v637 = vadd.f32 %v429, %v636
        %v638 = vpop.f32.mrf.mxu0
        %v639 = vadd.f32 %v429, %v638
        %640 = vdwg.mxu0
        %v641 = vmax.f32 %v547, 0.0
        %v642 = vmax.f32 %v549, 0.0
        %v643 = vmax.f32 %v553, 0.0
        %v644 = vmax.f32 %v555, 0.0
        %v645 = vmax.f32 %v559, 0.0
        %v646 = vmax.f32 %v561, 0.0
        %v647 = vmax.f32 %v565, 0.0
        %v648 = vmax.f32 %v567, 0.0
        %v649 = vmax.f32 %v571, 0.0
        %v650 = vmax.f32 %v573, 0.0
        %v651 = vmax.f32 %v577, 0.0
        %v652 = vmax.f32 %v579, 0.0
        %v653 = vmax.f32 %v583, 0.0
        %v654 = vmax.f32 %v585, 0.0
        %v655 = vmax.f32 %v589, 0.0
        %v656 = vmax.f32 %v591, 0.0
        %v657 = vmax.f32 %v595, 0.0
        %v658 = vmax.f32 %v597, 0.0
        %v659 = vmax.f32 %v601, 0.0
        %v660 = vmax.f32 %v603, 0.0
        %v661 = vmax.f32 %v607, 0.0
        %v662 = vmax.f32 %v609, 0.0
        %v663 = vmax.f32 %v613, 0.0
        %v664 = vmax.f32 %v615, 0.0
        %v665 = vmax.f32 %v619, 0.0
        %v666 = vmax.f32 %v621, 0.0
        %v667 = vmax.f32 %v625, 0.0
        %v668 = vmax.f32 %v627, 0.0
        %v669 = vmax.f32 %v631, 0.0
        %v670 = vmax.f32 %v633, 0.0
        %v671 = vmax.f32 %v637, 0.0
        %v672 = vmax.f32 %v639, 0.0
        %674 = vset.pattern.permute.xlu0 0
        %675 = vperm.xlu0 %674, %v329
        %v676 = vpop.permute.xlu0 %675
        %679 = vset.pattern.permute.xlu0 0
        %680 = vperm.xlu0 %679, %v330
        %v681 = vpop.permute.xlu0 %680
        %684 = vset.pattern.permute.xlu0 0
        %685 = vperm.xlu0 %684, %v331
        %v686 = vpop.permute.xlu0 %685
        %689 = vset.pattern.permute.xlu0 0
        %690 = vperm.xlu0 %689, %v332
        %v691 = vpop.permute.xlu0 %690
        %694 = vset.pattern.permute.xlu0 0
        %695 = vperm.xlu0 %694, %v333
        %v696 = vpop.permute.xlu0 %695
        %699 = vset.pattern.permute.xlu0 0
        %700 = vperm.xlu0 %699, %v334
        %v701 = vpop.permute.xlu0 %700
        %704 = vset.pattern.permute.xlu0 0
        %705 = vperm.xlu0 %704, %v335
        %v706 = vpop.permute.xlu0 %705
        %709 = vset.pattern.permute.xlu0 0
        %710 = vperm.xlu0 %709, %v336
        %v711 = vpop.permute.xlu0 %710
        %714 = vset.pattern.permute.xlu0 0
        %715 = vperm.xlu0 %714, %v337
        %v716 = vpop.permute.xlu0 %715
        %719 = vset.pattern.permute.xlu0 0
        %720 = vperm.xlu0 %719, %v338
        %v721 = vpop.permute.xlu0 %720
        %724 = vset.pattern.permute.xlu0 0
        %725 = vperm.xlu0 %724, %v339
        %v726 = vpop.permute.xlu0 %725
        %729 = vset.pattern.permute.xlu0 0
        %730 = vperm.xlu0 %729, %v340
        %v731 = vpop.permute.xlu0 %730
        %734 = vset.pattern.permute.xlu0 0
        %735 = vperm.xlu0 %734, %v341
        %v736 = vpop.permute.xlu0 %735
        %739 = vset.pattern.permute.xlu0 0
        %740 = vperm.xlu0 %739, %v342
        %v741 = vpop.permute.xlu0 %740
        %744 = vset.pattern.permute.xlu0 0
        %745 = vperm.xlu0 %744, %v343
        %v746 = vpop.permute.xlu0 %745
        %749 = vset.pattern.permute.xlu0 0
        %750 = vperm.xlu0 %749, %v344
        %v751 = vpop.permute.xlu0 %750
        %753 = vmatprep.subr.mxu0 %v672
        %754 = vmatpush1.msra.mxu0 %v671
        %755 = vmatprep.subr.mxu0 %v670
        %756 = vmatpush1.msra.mxu0 %v669
        %757 = vmatprep.subr.mxu0 %v668
        %758 = vmatpush1.msra.mxu0 %v667
        %759 = vmatprep.subr.mxu0 %v666
        %760 = vmatpush1.msra.mxu0 %v665
        %761 = vmatprep.subr.mxu0 %v664
        %762 = vmatpush1.msra.mxu0 %v663
        %763 = vmatprep.subr.mxu0 %v662
        %764 = vmatpush1.msra.mxu0 %v661
        %765 = vmatprep.subr.mxu0 %v660
        %766 = vmatpush1.msra.mxu0 %v659
        %767 = vmatprep.subr.mxu0 %v658
        %768 = vmatpush1.msra.mxu0 %v657
        %769 = vmatprep.subr.mxu0 %v656
        %770 = vmatpush1.msra.mxu0 %v655
        %771 = vmatprep.subr.mxu0 %v654
        %772 = vmatpush1.msra.mxu0 %v653
        %773 = vmatprep.subr.mxu0 %v652
        %774 = vmatpush1.msra.mxu0 %v651
        %775 = vmatprep.subr.mxu0 %v650
        %776 = vmatpush1.msra.mxu0 %v649
        %777 = vmatprep.subr.mxu0 %v648
        %778 = vmatpush1.msra.mxu0 %v647
        %779 = vmatprep.subr.mxu0 %v646
        %780 = vmatpush1.msra.mxu0 %v645
        %781 = vmatprep.subr.mxu0 %v644
        %782 = vmatpush1.msra.mxu0 %v643
        %783 = vmatprep.subr.mxu0 %v642
        %784 = vmatpush1.msra.mxu0 %v641
        %785 = vmatprep.subr.mxu0 0.0
        %786 = vmatpush2.msra.mxu0 0.0
        %787 = vmatprep.subr.mxu0 0.0
        %788 = vmatpush2.msra.mxu0 0.0
        %789 = vmatprep.subr.mxu0 0.0
        %790 = vmatpush2.msra.mxu0 0.0
        %791 = vmatprep.subr.mxu0 0.0
        %792 = vmatpush2.msra.mxu0 0.0
        %793 = vmatprep.subr.mxu0 0.0
        %794 = vmatpush2.msra.mxu0 0.0
        %795 = vmatprep.subr.mxu0 0.0
        %796 = vmatpush2.msra.mxu0 0.0
        %797 = vmatprep.subr.mxu0 0.0
        %798 = vmatpush2.msra.mxu0 0.0
        %799 = vmatprep.subr.mxu0 0.0
        %800 = vmatpush2.msra.mxu0 0.0
        %801 = vmatprep.subr.mxu0 0.0
        %802 = vmatpush2.msra.mxu0 0.0
        %803 = vmatprep.subr.mxu0 0.0
        %804 = vmatpush2.msra.mxu0 0.0
        %805 = vmatprep.subr.mxu0 0.0
        %806 = vmatpush2.msra.mxu0 0.0
        %807 = vmatprep.subr.mxu0 0.0
        %808 = vmatpush2.msra.mxu0 0.0
        %809 = vmatprep.subr.mxu0 0.0
        %810 = vmatpush2.msra.mxu0 0.0
        %811 = vmatprep.subr.mxu0 0.0
        %812 = vmatpush2.msra.mxu0 0.0
        %813 = vmatprep.subr.mxu0 0.0
        %814 = vmatpush2.msra.mxu0 0.0
        %815 = vmatprep.subr.mxu0 0.0
        %816 = vmatpush2.msra.mxu0 0.0
        %817 = vmatprep.mubr.f32.mxu0 0.0
        %818 = vmatmul.mubr.f32.gmra.mxu0 %v313
        %v819 = vpop.f32.mrf.mxu0
        %v820 = vadd.f32 %v676, %v819
        %v821 = vpop.f32.mrf.mxu0
        %v822 = vadd.f32 %v676, %v821
        %823 = vmatprep.mubr.f32.mxu0 0.0
        %824 = vmatmul.mubr.f32.gmra.mxu0 %v314
        %v825 = vpop.f32.mrf.mxu0
        %v826 = vadd.f32 %v681, %v825
        %v827 = vpop.f32.mrf.mxu0
        %v828 = vadd.f32 %v681, %v827
        %829 = vmatprep.mubr.f32.mxu0 0.0
        %830 = vmatmul.mubr.f32.gmra.mxu0 %v315
        %v831 = vpop.f32.mrf.mxu0
        %v832 = vadd.f32 %v686, %v831
        %v833 = vpop.f32.mrf.mxu0
        %v834 = vadd.f32 %v686, %v833
        %835 = vmatprep.mubr.f32.mxu0 0.0
        %836 = vmatmul.mubr.f32.gmra.mxu0 %v316
        %v837 = vpop.f32.mrf.mxu0
        %v838 = vadd.f32 %v691, %v837
        %v839 = vpop.f32.mrf.mxu0
        %v840 = vadd.f32 %v691, %v839
        %841 = vmatprep.mubr.f32.mxu0 0.0
        %842 = vmatmul.mubr.f32.gmra.mxu0 %v317
        %v843 = vpop.f32.mrf.mxu0
        %v844 = vadd.f32 %v696, %v843
        %v845 = vpop.f32.mrf.mxu0
        %v846 = vadd.f32 %v696, %v845
        %847 = vmatprep.mubr.f32.mxu0 0.0
        %848 = vmatmul.mubr.f32.gmra.mxu0 %v318
        %v849 = vpop.f32.mrf.mxu0
        %v850 = vadd.f32 %v701, %v849
        %v851 = vpop.f32.mrf.mxu0
        %v852 = vadd.f32 %v701, %v851
        %853 = vmatprep.mubr.f32.mxu0 0.0
        %854 = vmatmul.mubr.f32.gmra.mxu0 %v319
        %v855 = vpop.f32.mrf.mxu0
        %v856 = vadd.f32 %v706, %v855
        %v857 = vpop.f32.mrf.mxu0
        %v858 = vadd.f32 %v706, %v857
        %859 = vmatprep.mubr.f32.mxu0 0.0
        %860 = vmatmul.mubr.f32.gmra.mxu0 %v320
        %v861 = vpop.f32.mrf.mxu0
        %v862 = vadd.f32 %v711, %v861
        %v863 = vpop.f32.mrf.mxu0
        %v864 = vadd.f32 %v711, %v863
        %865 = vmatprep.mubr.f32.mxu0 0.0
        %866 = vmatmul.mubr.f32.gmra.mxu0 %v321
        %v867 = vpop.f32.mrf.mxu0
        %v868 = vadd.f32 %v716, %v867
        %v869 = vpop.f32.mrf.mxu0
        %v870 = vadd.f32 %v716, %v869
        %871 = vmatprep.mubr.f32.mxu0 0.0
        %872 = vmatmul.mubr.f32.gmra.mxu0 %v322
        %v873 = vpop.f32.mrf.mxu0
        %v874 = vadd.f32 %v721, %v873
        %v875 = vpop.f32.mrf.mxu0
        %v876 = vadd.f32 %v721, %v875
        %877 = vmatprep.mubr.f32.mxu0 0.0
        %878 = vmatmul.mubr.f32.gmra.mxu0 %v323
        %v879 = vpop.f32.mrf.mxu0
        %v880 = vadd.f32 %v726, %v879
        %v881 = vpop.f32.mrf.mxu0
        %v882 = vadd.f32 %v726, %v881
        %883 = vmatprep.mubr.f32.mxu0 0.0
        %884 = vmatmul.mubr.f32.gmra.mxu0 %v324
        %v885 = vpop.f32.mrf.mxu0
        %v886 = vadd.f32 %v731, %v885
        %v887 = vpop.f32.mrf.mxu0
        %v888 = vadd.f32 %v731, %v887
        %889 = vmatprep.mubr.f32.mxu0 0.0
        %890 = vmatmul.mubr.f32.gmra.mxu0 %v325
        %v891 = vpop.f32.mrf.mxu0
        %v892 = vadd.f32 %v736, %v891
        %v893 = vpop.f32.mrf.mxu0
        %v894 = vadd.f32 %v736, %v893
        %895 = vmatprep.mubr.f32.mxu0 0.0
        %896 = vmatmul.mubr.f32.gmra.mxu0 %v326
        %v897 = vpop.f32.mrf.mxu0
        %v898 = vadd.f32 %v741, %v897
        %v899 = vpop.f32.mrf.mxu0
        %v900 = vadd.f32 %v741, %v899
        %901 = vmatprep.mubr.f32.mxu0 0.0
        %902 = vmatmul.mubr.f32.gmra.mxu0 %v327
        %v903 = vpop.f32.mrf.mxu0
        %v904 = vadd.f32 %v746, %v903
        %v905 = vpop.f32.mrf.mxu0
        %v906 = vadd.f32 %v746, %v905
        %907 = vmatprep.mubr.f32.mxu0 0.0
        %908 = vmatmul.mubr.f32.gmra.mxu0 %v328
        %v909 = vpop.f32.mrf.mxu0
        %v910 = vadd.f32 %v751, %v909
        %v911 = vpop.f32.mrf.mxu0
        %v912 = vadd.f32 %v751, %v911
        %913 = vdwg.mxu0
        %v914 = vmax.f32 %v820, 0.0
        %v915 = vmax.f32 %v822, 0.0
        %v916 = vmax.f32 %v826, 0.0
        %v917 = vmax.f32 %v828, 0.0
        %v918 = vmax.f32 %v832, 0.0
        %v919 = vmax.f32 %v834, 0.0
        %v920 = vmax.f32 %v838, 0.0
        %v921 = vmax.f32 %v840, 0.0
        %v922 = vmax.f32 %v844, 0.0
        %v923 = vmax.f32 %v846, 0.0
        %v924 = vmax.f32 %v850, 0.0
        %v925 = vmax.f32 %v852, 0.0
        %v926 = vmax.f32 %v856, 0.0
        %v927 = vmax.f32 %v858, 0.0
        %v928 = vmax.f32 %v862, 0.0
        %v929 = vmax.f32 %v864, 0.0
        %v930 = vmax.f32 %v868, 0.0
        %v931 = vmax.f32 %v870, 0.0
        %v932 = vmax.f32 %v874, 0.0
        %v933 = vmax.f32 %v876, 0.0
        %v934 = vmax.f32 %v880, 0.0
        %v935 = vmax.f32 %v882, 0.0
        %v936 = vmax.f32 %v886, 0.0
        %v937 = vmax.f32 %v888, 0.0
        %v938 = vmax.f32 %v892, 0.0
        %v939 = vmax.f32 %v894, 0.0
        %v940 = vmax.f32 %v898, 0.0
        %v941 = vmax.f32 %v900, 0.0
        %v942 = vmax.f32 %v904, 0.0
        %v943 = vmax.f32 %v906, 0.0
        %v944 = vmax.f32 %v910, 0.0
        %v945 = vmax.f32 %v912, 0.0
        %v946 = vadd.f32 %v914, %v930
        %v947 = vadd.f32 %v915, %v931
        %v948 = vadd.f32 %v916, %v932
        %v949 = vadd.f32 %v917, %v933
        %v950 = vadd.f32 %v918, %v934
        %v951 = vadd.f32 %v919, %v935
        %v952 = vadd.f32 %v920, %v936
        %v953 = vadd.f32 %v921, %v937
        %v954 = vadd.f32 %v922, %v938
        %v955 = vadd.f32 %v923, %v939
        %v956 = vadd.f32 %v924, %v940
        %v957 = vadd.f32 %v925, %v941
        %v958 = vadd.f32 %v926, %v942
        %v959 = vadd.f32 %v927, %v943
        %v960 = vadd.f32 %v928, %v944
        %v961 = vadd.f32 %v929, %v945
        %962 = vst [vmem:[%s271] sm:$0xff] %v946
        %vm963 = vcmask 588800
        %964 = vst.msk [vmem:[%s271 + $0x8] sm:$0xff] %vm963, %v947
        %965 = vst [vmem:[%s271 + $0x10] sm:$0xff] %v948
        %966 = vst.msk [vmem:[%s271 + $0x18] sm:$0xff] %vm963, %v949
        %967 = vst [vmem:[%s271 + $0x20] sm:$0xff] %v950
        %968 = vst.msk [vmem:[%s271 + $0x28] sm:$0xff] %vm963, %v951
        %969 = vst [vmem:[%s271 + $0x30] sm:$0xff] %v952
        %970 = vst.msk [vmem:[%s271 + $0x38] sm:$0xff] %vm963, %v953
        %971 = vst [vmem:[%s271 + $0x40] sm:$0xff] %v954
        %972 = vst.msk [vmem:[%s271 + $0x48] sm:$0xff] %vm963, %v955
        %973 = vst [vmem:[%s271 + $0x50] sm:$0xff] %v956
        %974 = vst.msk [vmem:[%s271 + $0x58] sm:$0xff] %vm963, %v957
        %975 = vst [vmem:[%s271 + $0x60] sm:$0xff] %v958
        %976 = vst.msk [vmem:[%s271 + $0x68] sm:$0xff] %vm963, %v959
        %977 = vst [vmem:[%s271 + $0x70] sm:$0xff] %v960
        %978 = vst.msk [vmem:[%s271 + $0x78] sm:$0xff] %vm963, %v961
        %s979 = sand.u32 %s181, 1
        %s980 = scalar_lea.sflag [#allocation3], %s979
        %s981 = sand.u32 %s181, 1
        %s982 = smul.addr %s981, 128
        %s983 = scalar_lea.vmem [#allocation2], %s982
        // Predicated region
        $region49: #{tpu_custom_call.1} parent=47 // pred_check
          %p984 = pneg %p191
        $region50: #{tpu_custom_call.1} parent=47 // pred_check_branch
          %986 = sbr.rel (%p984) target = $region52
        $region51: #{tpu_custom_call.1} parent=47 // pred_region
          %s988 = ssub.s32 2048, 2048
          %989 = vsyncadd %s980, %s988
          %s990 = smul.addr %s21, 16
          %s991 = smul.addr %s990, 128
          %s992 = scalar_lea.hbm %s7, %s991
          %s993 = sshll.u32 %s983, 4
          %s994 = int_to_ptr.vmem [resolvable:$true] %s993
          %999 = dma.vmem_to_hbm [thread:$0]  %s994, 2048, %s992, %s980, 256, 256, 16
        $region52: #{tpu_custom_call.1} parent=47 // pred_fallthru
          _
      $region48: #{tpu_custom_call.1} parent=5 // pred_fallthru
        _
      %p1000 = scmp.le.s32.totalorder 2, %s16
      // Predicated region
      $region53: #{tpu_custom_call.1} parent=5 // pred_check
        %p1001 = pneg %p1000
      $region54: #{tpu_custom_call.1} parent=5 // pred_check_branch
        %1003 = sbr.rel (%p1001) target = $region56
      $region55: #{tpu_custom_call.1} parent=5 // pred_region
        %s1004 = ssub.s32 %s16, 2
        // Predicated region
        $region57: #{tpu_custom_call.1} parent=55 // pred_check
          %p1005 = pneg %p197
        $region58: #{tpu_custom_call.1} parent=55 // pred_check_branch
          %1007 = sbr.rel (%p1005) target = $region60
        $region59: #{tpu_custom_call.1} parent=55 // pred_region
          %s1008 = sand.u32 %s182, 1
          %s1009 = scalar_lea.sflag [#allocation3], %s1008
          %s1010 = sand.u32 %s182, 1
          %s1011 = smul.addr %s1010, 128
          %s1012 = scalar_lea.vmem [#allocation2], %s1011
          %1013 = dma.done %s1009, 2048
        $region60: #{tpu_custom_call.1} parent=55 // pred_fallthru
          _
      $region56: #{tpu_custom_call.1} parent=5 // pred_fallthru
        _
    $region6: #{tpu_custom_call.1} parent=1 // loop_footer
      %s20 = sadd.s32 1, %s16
    $region7: #{tpu_custom_call.1} parent=1 // loop_footer_branch
      %15 = sbr.rel target = $region3
    $region8: #{tpu_custom_call.1} parent=1 // loop_exit
      _
    %1014 = vsyncpa [#allocation3], 1
    %s1015 = scalar_lea.sflag [#allocation3], 1
    %1016 = vsyncpa %s1015, 1

</llo_original>
